<compile_context>
chip_gen: v7x
topology: tpu7x:2x2x1
jax: 0.10.0
libtpu: 0.0.40
codegen_flags: <defaults>
</compile_context>

<pallas_src>
import functools

import jax
import jax.numpy as jnp
from jax.experimental import pallas as pl
from jax.experimental.pallas import tpu as pltpu


def _round_up(x, m):
    return (x + m - 1) // m * m


def _token_type_kernel(ids_ref, table_ref, out_ref):
    # ids_ref:   (TM, 1) int32   -- token-type ids for this row tile
    # table_ref: (T,  D) float32 -- full embedding table (resident in VMEM)
    # out_ref:   (TM, D) out_dtype
    T = table_ref.shape[0]
    # Clamp like jnp.take (TPU clamp mode); keeps out-of-range / partial-block
    # garbage ids well-defined.
    ids = jnp.clip(ids_ref[...], 0, T - 1)                        # (TM, 1)

    # T-way VPU select chain (no MXU, no lane-sparse one-hot intermediates).
    acc = jnp.broadcast_to(table_ref[pl.ds(0, 1), :], out_ref.shape)
    for t in range(1, T):                                         # T is 2-4: unrolled
        acc = jnp.where(ids == t, table_ref[pl.ds(t, 1), :], acc)
    out_ref[...] = acc.astype(out_ref.dtype)


def _vmem_budget_bytes():
    """Generation-aware scoped-VMEM limit and working budget."""
    try:
        cap = int(pltpu.get_tpu_info().vmem_capacity_bytes)
    except Exception:
        cap = 64 << 20                       # conservative (v7x-sized) fallback
    limit = min(cap // 2, 64 << 20)          # ~32 MiB on v7x, 64 MiB on v5e/v6e
    budget = max(limit - (4 << 20), 8 << 20)  # headroom for Mosaic internal scratch
    return budget, limit


def _pick_tile_rows(sn, d, t, budget):
    """Largest multiple-of-8 row tile fitting the VMEM budget, preferring an
    EVEN grid step count (v7x shards the 'parallel' axis across 2 TensorCores)."""
    d_lane = _round_up(d, 128)                         # VMEM lane padding of a row
    table_bytes = 2 * _round_up(t, 8) * d_lane * 4     # full table, double-buffered
    # Per-row VMEM: double-buffered output tile + the (TM, 1) int32 ids tile,
    # which is lane-padded to 128 ints in VMEM (512 B/row/buffer), NOT 4 B/row.
    per_row = 2 * d_lane * 4 + 2 * 128 * 4
    avail = max(budget - table_bytes, 8 * per_row)
    max_rows = max(8, (avail // per_row) // 8 * 8)

    sn8 = _round_up(sn, 8)
    if sn8 <= max_rows:
        # Whole problem fits in one tile; still split into 2 even steps when
        # there are >= 16 rows so both v7x TCs get work.
        return _round_up(pl.cdiv(sn8, 2), 8) if sn8 >= 16 else sn8

    # Need several steps: smallest step count that fits the budget and is even.
    min_steps = pl.cdiv(sn8, max_rows)
    for steps in range(min_steps, min_steps + 16):
        rows = _round_up(pl.cdiv(sn8, steps), 8)
        if rows <= max_rows and pl.cdiv(sn8, rows) % 2 == 0:
            return rows
    # No even split with multiple-of-8 tiles: take the largest fitting tile.
    return max(8, min(max_rows, _round_up(pl.cdiv(sn8, min_steps), 8)))


@functools.partial(jax.jit, static_argnames=("tile_rows", "vmem_limit", "out_dtype"))
def _token_type_lookup(ids_flat, table, tile_rows, vmem_limit, out_dtype):
    SN, _ = ids_flat.shape
    T, D = table.shape
    grid = (pl.cdiv(SN, tile_rows),)

    out_bytes = SN * D * jnp.dtype(out_dtype).itemsize
    cost = pl.CostEstimate(
        flops=2 * (T - 1) * SN * D,                      # compares + selects
        transcendentals=0,
        bytes_accessed=SN * 4 + T * D * 4 + out_bytes,   # true (unpadded) traffic
    )

    return pl.pallas_call(
        _token_type_kernel,
        out_shape=jax.ShapeDtypeStruct((SN, D), out_dtype),
        grid_spec=pltpu.PrefetchScalarGridSpec(
            num_scalar_prefetch=0,
            grid=grid,
            in_specs=[
                pl.BlockSpec((tile_rows, 1), lambda i: (i, 0)),   # ids row tile
                pl.BlockSpec((T, D), lambda i: (0, 0)),           # full table, resident
            ],
            out_specs=pl.BlockSpec((tile_rows, D), lambda i: (i, 0)),
        ),
        compiler_params=pltpu.CompilerParams(
            dimension_semantics=("parallel",),
            vmem_limit_bytes=vmem_limit,
        ),
        cost_estimate=cost,
    )(ids_flat, table)


def token_type_encoding(token_type_input, table, *, tile_rows=None,
                        out_dtype=jnp.float32):
    """token_type_input: (S, N) int; table: (T, D) f32 -> (S, N, D) out_dtype."""
    token_type_input = jnp.asarray(token_type_input)
    table = jnp.asarray(table, dtype=jnp.float32)
    S, N = token_type_input.shape
    T, D = table.shape
    SN = S * N

    budget, limit = _vmem_budget_bytes()
    if tile_rows is None:
        tile_rows = _pick_tile_rows(SN, D, T, budget)

    # Token-type vocabularies are tiny, so an int32 id is lossless.
    ids_flat = token_type_input.reshape(SN, 1).astype(jnp.int32)
    out = _token_type_lookup(ids_flat, table, tile_rows, limit, out_dtype)
    return out.reshape(S, N, D)


class TokenTypeEncodingPallas:
    """Mirror of the PyTorch module; params initialized deterministically."""

    def __init__(self, type_token_num, d_model, key):
        # nn.Embedding weight, init_weights(): normal(mean=0.0, std=0.02)
        self.weight = 0.02 * jax.random.normal(
            key, (type_token_num, d_model), dtype=jnp.float32)
        self.type_token_num = type_token_num
        self.d_model = d_model

    def __call__(self, seq_input, token_type_input=None):
        S, N = seq_input.shape[0], seq_input.shape[1]
        if token_type_input is None:
            token_type_input = jnp.zeros((S, N), dtype=jnp.int32)
        return token_type_encoding(token_type_input, self.weight)


if __name__ == "__main__":
    key = jax.random.PRNGKey(0)
    k_w, k_seq, k_tok, k_w2, k_tok2 = jax.random.split(key, 5)

    # --- Case 1: small BERT-ish shapes (D < 128 exercises the unpadded-D path)
    S, N = 8, 2                      # (seq_len, batch) -- PyTorch BERT axis order
    type_token_num = 4
    d_model = 32

    module = TokenTypeEncodingPallas(type_token_num, d_model, k_w)
    seq_input = jax.random.randint(k_seq, (S, N), 0, 100, dtype=jnp.int32)
    token_type_input = jax.random.randint(
        k_tok, (S, N), 0, type_token_num, dtype=jnp.int32)

    out = jax.block_until_ready(module(seq_input, token_type_input))
    out_none = jax.block_until_ready(module(seq_input, None))

    ref = jnp.take(module.weight, token_type_input, axis=0)          # (S, N, D)
    ref_none = jnp.broadcast_to(module.weight[0], (S, N, d_model))
    assert out.shape == (S, N, d_model) and out.dtype == jnp.float32
    assert jnp.allclose(out, ref, atol=1e-6)
    assert jnp.allclose(out_none, ref_none, atol=1e-6)

    # --- Case 2: non-multiple-of-8 S*N (exercises the partial last block path)
    S2, N2, d2 = 7, 3, 64
    module2 = TokenTypeEncodingPallas(2, d2, k_w2)
    seq2 = jnp.zeros((S2, N2), dtype=jnp.int32)
    tok2 = jax.random.randint(k_tok2, (S2, N2), 0, 2, dtype=jnp.int32)
    out2 = jax.block_until_ready(module2(seq2, tok2))
    ref2 = jnp.take(module2.weight, tok2, axis=0)
    assert out2.shape == (S2, N2, d2)
    assert jnp.allclose(out2, ref2, atol=1e-6)

    print("KERNEL_OK")
</pallas_src>

<mosaic_0001>
module attributes {stable_mosaic.version = 11 : i64} {
  func.func @_token_type_kernel(%arg0: i32, %arg1: memref<8x1xi32, #tpu.memory_space<vmem>>, %arg2: memref<4x32xf32, #tpu.memory_space<vmem>>, %arg3: memref<8x32xf32, #tpu.memory_space<vmem>>) attributes {dimension_semantics = [#tpu.dimension_semantics<parallel>], iteration_bounds = array<i64: 2>, scalar_prefetch = 0 : i64, scratch_operands = 0 : i64, tpu.core_type = #tpu.core_type<tc>, window_params = [{transform_indices = @transform_0, window_bounds = array<i64: 8, 1>}, {pipeline_mode = #tpu.pipeline_mode<synchronous>, transform_indices = @transform_1, window_bounds = array<i64: 4, 32>}, {transform_indices = @transform_2, window_bounds = array<i64: 8, 32>}]} {
    %c0 = arith.constant 0 : index
    %c0_0 = arith.constant 0 : index
    %0 = vector.load %arg1[%c0, %c0_0] : memref<8x1xi32, #tpu.memory_space<vmem>>, vector<8x1xi32>
    %c0_i32 = arith.constant 0 : i32
    %c3_i32 = arith.constant 3 : i32
    %1 = vector.broadcast %c0_i32 : i32 to vector<8x1xi32>
    %2 = arith.maxsi %1, %0 : vector<8x1xi32>
    %3 = vector.broadcast %c3_i32 : i32 to vector<8x1xi32>
    %4 = arith.minsi %3, %2 : vector<8x1xi32>
    %c0_1 = arith.constant 0 : index
    %c0_2 = arith.constant 0 : index
    %5 = vector.load %arg2[%c0_1, %c0_2] : memref<4x32xf32, #tpu.memory_space<vmem>>, vector<1x32xf32>
    %6 = vector.shape_cast %5 : vector<1x32xf32> to vector<1x32xf32>
    %7 = vector.broadcast %6 : vector<1x32xf32> to vector<8x32xf32>
    %c1_i32 = arith.constant 1 : i32
    %8 = vector.broadcast %c1_i32 : i32 to vector<8x1xi32>
    %9 = arith.cmpi eq, %4, %8 : vector<8x1xi32>
    %c1 = arith.constant 1 : index
    %c0_3 = arith.constant 0 : index
    %10 = vector.load %arg2[%c1, %c0_3] : memref<4x32xf32, #tpu.memory_space<vmem>>, vector<1x32xf32>
    %11 = vector.shape_cast %9 : vector<8x1xi1> to vector<8x1xi1>
    %12 = vector.broadcast %11 : vector<8x1xi1> to vector<8x32xi1>
    %13 = vector.shape_cast %10 : vector<1x32xf32> to vector<1x32xf32>
    %14 = vector.broadcast %13 : vector<1x32xf32> to vector<8x32xf32>
    %15 = arith.select %12, %14, %7 : vector<8x32xi1>, vector<8x32xf32>
    %c2_i32 = arith.constant 2 : i32
    %16 = vector.broadcast %c2_i32 : i32 to vector<8x1xi32>
    %17 = arith.cmpi eq, %4, %16 : vector<8x1xi32>
    %c2 = arith.constant 2 : index
    %c0_4 = arith.constant 0 : index
    %18 = vector.load %arg2[%c2, %c0_4] : memref<4x32xf32, #tpu.memory_space<vmem>>, vector<1x32xf32>
    %19 = vector.shape_cast %17 : vector<8x1xi1> to vector<8x1xi1>
    %20 = vector.broadcast %19 : vector<8x1xi1> to vector<8x32xi1>
    %21 = vector.shape_cast %18 : vector<1x32xf32> to vector<1x32xf32>
    %22 = vector.broadcast %21 : vector<1x32xf32> to vector<8x32xf32>
    %23 = arith.select %20, %22, %15 : vector<8x32xi1>, vector<8x32xf32>
    %c3_i32_5 = arith.constant 3 : i32
    %24 = vector.broadcast %c3_i32_5 : i32 to vector<8x1xi32>
    %25 = arith.cmpi eq, %4, %24 : vector<8x1xi32>
    %c3 = arith.constant 3 : index
    %c0_6 = arith.constant 0 : index
    %26 = vector.load %arg2[%c3, %c0_6] : memref<4x32xf32, #tpu.memory_space<vmem>>, vector<1x32xf32>
    %27 = vector.shape_cast %25 : vector<8x1xi1> to vector<8x1xi1>
    %28 = vector.broadcast %27 : vector<8x1xi1> to vector<8x32xi1>
    %29 = vector.shape_cast %26 : vector<1x32xf32> to vector<1x32xf32>
    %30 = vector.broadcast %29 : vector<1x32xf32> to vector<8x32xf32>
    %31 = arith.select %28, %30, %23 : vector<8x32xi1>, vector<8x32xf32>
    %c0_7 = arith.constant 0 : index
    %c0_8 = arith.constant 0 : index
    %32 = vector.load %arg3[%c0_7, %c0_8] : memref<8x32xf32, #tpu.memory_space<vmem>>, vector<8x32xf32>
    tpu.vector_store %arg3[%c0_7, %c0_8], %31 {strides = array<i32>} : memref<8x32xf32, #tpu.memory_space<vmem>>, vector<8x32xf32>,
    return
  }
  func.func @transform_0(%arg0: i32) -> (i32, i32) {
    %c0_i32 = arith.constant 0 : i32
    %c0_i32_0 = arith.constant 0 : i32
    return %arg0, %c0_i32 : i32, i32
  }
  func.func @transform_1(%arg0: i32) -> (i32, i32) {
    %c0_i32 = arith.constant 0 : i32
    %c0_i32_0 = arith.constant 0 : i32
    %c0_i32_1 = arith.constant 0 : i32
    return %c0_i32, %c0_i32_0 : i32, i32
  }
  func.func @transform_2(%arg0: i32) -> (i32, i32) {
    %c0_i32 = arith.constant 0 : i32
    %c0_i32_0 = arith.constant 0 : i32
    return %arg0, %c0_i32 : i32, i32
  }
}

</mosaic_0001>

<llo_original>
// kernel: _token_type_lookup.1
$region0: #{_token_type_lookup.1}
  #allocation0 [shape = 'u32[]', space=smem, size = 0x4, offset = 0x4, fixed_abs, tag = 'smem constant byte address 0x4 - core index']
  #allocation1 [shape = 'u32[144,128]{1,0:T(1,128)}', space=vmem, size = 0x12000, scoped, tag = 'internal scratch']
  %s0 = inlined_call_operand.vmem [shape: s32[16,1], index: 0, kind: input, shape index: {}]
  %s1 = inlined_call_operand.vmem [shape: f32[4,32], index: 1, kind: input, shape index: {}]
  %s2 = inlined_call_operand.hbm [shape: f32[16,32], index: 2, kind: output, shape index: {}]
  %s3 = sld [smem:[#allocation0]]
  $region41: #{_token_type_lookup.1} parent=0
    _
  %s5 = ssub.s32 1, %s3
  %s6 = scalar_select 0, %s5, %s3
  $region1: #{_token_type_lookup.1} parent=0
    #allocation2 [shape = 'u8[8192]{0}', space=vmem, size = 0x2000, scoped, tag = 'output window, operand 0']
    #allocation3 [shape = 's32[2]{0}', space=sflag, size = 0x8, scoped, tag = 'scoped memory for _token_type_lookup.1']
    %7 = vsyncpa [#allocation3], 0
    %s8 = scalar_lea.sflag [#allocation3], 1
    %9 = vsyncpa %s8, 0
    loop: start=0, step=1, limit=4
    $region2: #{_token_type_lookup.1} parent=1 // loop_pre_header
      _
    $region3: #{_token_type_lookup.1} parent=1 // loop_header
      %s11 = sphi 0, %s15
      %p12 = scmp.ge.s32.totalorder %s11, 4
      %s21 = sphi 0, %s23
      %s24 = sphi 0, %s21
      %s25 = sphi 0, %s24
      %s41 = sphi 0, %s25
      %s45 = sphi 0, %s45
      %s47 = sphi 0, %s45
      %s48 = sphi 0, %s47
      %s62 = sphi 0, %s48
      %s68 = sphi 0, %s70
      %s71 = sphi 0, %s68
      %s72 = sphi 0, %s71
      %s88 = sphi 0, %s72
    $region4: #{_token_type_lookup.1} parent=1 // loop_header_branch
      %14 = sbr.rel (%p12) target = $region8
    $region5: #{_token_type_lookup.1} parent=1 // loop_body
      %s16 = ssub.s32 %s11, 1
      %s17 = ssub.s32 %s11, 2
      %s18 = sadd.s32 %s11, 1
      %s19 = ssub.s32 %s11, %s18
      %p20 = scmp.eq.s32.totalorder %s19, 0
      %s22 = sadd.s32 %s21, 1
      %s23 = scalar_select %p20, %s21, %s22
      %p26 = pneg %p20
      %p27 = scmp.eq.s32.totalorder %s11, 1
      %p28 = por %p26, %p27
      %p29 = scmp.ne.s32.totalorder %s21, %s24
      %p30 = scmp.eq.s32.totalorder %s11, 0
      %p31 = por %p29, %p30
      %p32 = scmp.ne.s32.totalorder %s21, %s24
      %p33 = scmp.eq.s32.totalorder %s16, 1
      %p34 = por %p32, %p33
      %p35 = scmp.ne.s32.totalorder %s24, %s25
      %p36 = scmp.eq.s32.totalorder %s16, 0
      %p37 = por %p35, %p36
      %p38 = scmp.ne.s32.totalorder %s24, %s25
      %p39 = scmp.eq.s32.totalorder %s17, 1
      %p40 = por %p38, %p39
      %p42 = scmp.ne.s32.totalorder %s25, %s41
      %p43 = scmp.eq.s32.totalorder %s17, 0
      %p44 = por %p42, %p43
      %s46 = sadd.s32 %s45, 1
      %p49 = scmp.eq.s32.totalorder %s11, 1
      %p50 = scmp.ne.s32.totalorder %s45, %s47
      %p51 = scmp.eq.s32.totalorder %s11, 0
      %p52 = por %p50, %p51
      %p53 = scmp.ne.s32.totalorder %s45, %s47
      %p54 = scmp.eq.s32.totalorder %s16, 1
      %p55 = por %p53, %p54
      %p56 = scmp.ne.s32.totalorder %s47, %s48
      %p57 = scmp.eq.s32.totalorder %s16, 0
      %p58 = por %p56, %p57
      %p59 = scmp.ne.s32.totalorder %s47, %s48
      %p60 = scmp.eq.s32.totalorder %s17, 1
      %p61 = por %p59, %p60
      %p63 = scmp.ne.s32.totalorder %s48, %s62
      %p64 = scmp.eq.s32.totalorder %s17, 0
      %p65 = por %p63, %p64
      %s66 = ssub.s32 %s11, %s18
      %p67 = scmp.eq.s32.totalorder %s66, 0
      %s69 = sadd.s32 %s68, 1
      %s70 = scalar_select %p67, %s68, %s69
      %p73 = pneg %p67
      %p74 = scmp.eq.s32.totalorder %s11, 1
      %p75 = por %p73, %p74
      %p76 = scmp.ne.s32.totalorder %s68, %s71
      %p77 = scmp.eq.s32.totalorder %s11, 0
      %p78 = por %p76, %p77
      %p79 = scmp.ne.s32.totalorder %s68, %s71
      %p80 = scmp.eq.s32.totalorder %s16, 1
      %p81 = por %p79, %p80
      %p82 = scmp.ne.s32.totalorder %s71, %s72
      %p83 = scmp.eq.s32.totalorder %s16, 0
      %p84 = por %p82, %p83
      %p85 = scmp.ne.s32.totalorder %s71, %s72
      %p86 = scmp.eq.s32.totalorder %s17, 1
      %p87 = por %p85, %p86
      %p89 = scmp.ne.s32.totalorder %s72, %s88
      %p90 = scmp.eq.s32.totalorder %s17, 0
      %p91 = por %p89, %p90
      %p92 = scmp.le.s32.totalorder 1, %s11
      %p93 = scmp.lt.s32.totalorder %s11, 3
      %p94 = pnand %p92, %p93
      %p95 = pneg %p94
      // Predicated region
      $region9: #{_token_type_lookup.1} parent=5 // pred_check
        _
      $region10: #{_token_type_lookup.1} parent=5 // pred_check_branch
        %97 = sbr.rel (%p94) target = $region12
      $region11: #{_token_type_lookup.1} parent=5 // pred_region
        %s98 = ssub.s32 %s11, 1
        // Predicated region
        $region13: #{_token_type_lookup.1} parent=11 // pred_check
          %p99 = pneg %p58
        $region14: #{_token_type_lookup.1} parent=11 // pred_check_branch
          %101 = sbr.rel (%p99) target = $region16
        $region15: #{_token_type_lookup.1} parent=11 // pred_region
          _
        $region16: #{_token_type_lookup.1} parent=11 // pred_fallthru
          _
      $region12: #{_token_type_lookup.1} parent=5 // pred_fallthru
        _
      %p102 = scmp.lt.s32.totalorder %s11, 2
      // Predicated region
      $region17: #{_token_type_lookup.1} parent=5 // pred_check
        %p103 = pneg %p102
      $region18: #{_token_type_lookup.1} parent=5 // pred_check_branch
        %105 = sbr.rel (%p103) target = $region20
      $region19: #{_token_type_lookup.1} parent=5 // pred_region
        // Predicated region
        $region21: #{_token_type_lookup.1} parent=19 // pred_check
          %p106 = pneg %p31
        $region22: #{_token_type_lookup.1} parent=19 // pred_check_branch
          %108 = sbr.rel (%p106) target = $region24
        $region23: #{_token_type_lookup.1} parent=19 // pred_region
          %p109 = scmp.lt.s32.totalorder %s11, 1
          %s110 = scalar_select %p109, %s11, 1
          %s111 = smul.addr %s110, 8
          %s112 = scalar_lea.vmem %s0, %s111
        $region24: #{_token_type_lookup.1} parent=19 // pred_fallthru
          _
      $region20: #{_token_type_lookup.1} parent=5 // pred_fallthru
        _
      %p113 = scmp.le.s32.totalorder 1, %s11
      %p114 = scmp.lt.s32.totalorder %s11, 3
      %p115 = pnand %p113, %p114
      %p116 = pneg %p115
      // Predicated region
      $region25: #{_token_type_lookup.1} parent=5 // pred_check
        _
      $region26: #{_token_type_lookup.1} parent=5 // pred_check_branch
        %118 = sbr.rel (%p115) target = $region28
      $region27: #{_token_type_lookup.1} parent=5 // pred_region
        %s119 = ssub.s32 %s11, 1
        %p120 = scmp.lt.s32.totalorder %s16, 1
        %s121 = scalar_select %p120, %s16, 1
        %s122 = smul.addr %s121, 8
        %s123 = scalar_lea.vmem %s0, %s122
        %p124 = pneg %p37
        %p125 = pneg %p34
        %p126 = pneg %p58
        %p127 = pneg %p55
        %p128 = pneg %p84
        %p129 = pneg %p81
        %s130 = sand.u32 %s71, 1
        %s131 = scalar_lea.sflag [#allocation3], %s130
        %s132 = sand.u32 %s71, 1
        %s133 = smul.addr %s132, 8
        %s134 = scalar_lea.vmem [#allocation2], %s133
        %p135 = scmp.lt.s32.totalorder %s16, 1
        %s136 = scalar_select %p135, %s16, 1
        %s137 = smul.addr %s136, 8
        %s138 = scalar_lea.vmem %s0, %s137
        %v139 = vld [vmem:[%s138] sm:$0xff]
        %vm140 = vcmp.gt.s32.totalorder %v139, 0
        %v141 = vsel %vm140, %v139, 0
        %vm142 = vcmp.lt.s32.totalorder %v141, 3
        %v143 = vsel %vm142, %v141, 3
        %v144 = vld [vmem:[%s1] sm:$0x1]
        %v145 = vlaneseq
        %v146 = vshrl.u32 %v145, 7
        %v147 = vsub.s32 0, %v146
        %v148 = vrot.slane %v144, %v147
        %vm149 = vcmp.eq.s32.totalorder %v143, 1
        %v150 = vld [vmem:[%s1 + $0x1] sm:$0x1]
        %v151 = vsel %vm149, 1, 0
        %152 = vset.pattern.permute.xlu0 0
        %153 = vperm.xlu0 %152, %v151
        %v154 = vpop.permute.xlu0 %153
        %vm155 = vcmp.eq.s32.totalorder %v154, 1
        %v156 = vlaneseq
        %v157 = vshrl.u32 %v156, 7
        %v158 = vsub.s32 0, %v157
        %v159 = vrot.slane %v150, %v158
        %v160 = vsel %vm155, %v159, %v148
        %vm161 = vcmp.eq.s32.totalorder %v143, 2
        %v162 = vld [vmem:[%s1 + $0x2] sm:$0x1]
        %v163 = vsel %vm161, 1, 0
        %164 = vset.pattern.permute.xlu0 0
        %165 = vperm.xlu0 %164, %v163
        %v166 = vpop.permute.xlu0 %165
        %vm167 = vcmp.eq.s32.totalorder %v166, 1
        %v168 = vlaneseq
        %v169 = vshrl.u32 %v168, 7
        %v170 = vsub.s32 0, %v169
        %v171 = vrot.slane %v162, %v170
        %v172 = vsel %vm167, %v171, %v160
        %vm173 = vcmp.eq.s32.totalorder %v143, 3
        %v174 = vld [vmem:[%s1 + $0x3] sm:$0x1]
        %v175 = vsel %vm173, 1, 0
        %176 = vset.pattern.permute.xlu0 0
        %177 = vperm.xlu0 %176, %v175
        %v178 = vpop.permute.xlu0 %177
        %vm179 = vcmp.eq.s32.totalorder %v178, 1
        %v180 = vlaneseq
        %v181 = vshrl.u32 %v180, 7
        %v182 = vsub.s32 0, %v181
        %v183 = vrot.slane %v174, %v182
        %v184 = vsel %vm179, %v183, %v172
        %vm185 = vcmask 261120
        %186 = vst.msk [vmem:[%s134] sm:$0xff] %vm185, %v184
        %s187 = sand.u32 %s71, 1
        %s188 = scalar_lea.sflag [#allocation3], %s187
        %s189 = sand.u32 %s71, 1
        %s190 = smul.addr %s189, 8
        %s191 = scalar_lea.vmem [#allocation2], %s190
        // Predicated region
        $region29: #{_token_type_lookup.1} parent=27 // pred_check
          %p192 = pneg %p81
        $region30: #{_token_type_lookup.1} parent=27 // pred_check_branch
          %194 = sbr.rel (%p192) target = $region32
        $region31: #{_token_type_lookup.1} parent=27 // pred_region
          %s196 = ssub.s32 128, 128
          %197 = vsyncadd %s188, %s196
          %s198 = smul.addr %s16, 128
          %s199 = scalar_lea.hbm %s2, %s198
          %s201 = sshll.u32 %s191, 4
          %s202 = int_to_ptr.vmem [resolvable:$true] %s201
          %204 = dma.vmem_to_hbm [thread:$0]  %s202, 128, %s199, %s188
        $region32: #{_token_type_lookup.1} parent=27 // pred_fallthru
          _
      $region28: #{_token_type_lookup.1} parent=5 // pred_fallthru
        _
      %p205 = scmp.le.s32.totalorder 2, %s11
      // Predicated region
      $region33: #{_token_type_lookup.1} parent=5 // pred_check
        %p206 = pneg %p205
      $region34: #{_token_type_lookup.1} parent=5 // pred_check_branch
        %208 = sbr.rel (%p206) target = $region36
      $region35: #{_token_type_lookup.1} parent=5 // pred_region
        %s209 = ssub.s32 %s11, 2
        // Predicated region
        $region37: #{_token_type_lookup.1} parent=35 // pred_check
          %p210 = pneg %p87
        $region38: #{_token_type_lookup.1} parent=35 // pred_check_branch
          %212 = sbr.rel (%p210) target = $region40
        $region39: #{_token_type_lookup.1} parent=35 // pred_region
          %s213 = sand.u32 %s72, 1
          %s214 = scalar_lea.sflag [#allocation3], %s213
          %s215 = sand.u32 %s72, 1
          %s216 = smul.addr %s215, 8
          %s217 = scalar_lea.vmem [#allocation2], %s216
          %218 = dma.done %s214, 128
        $region40: #{_token_type_lookup.1} parent=35 // pred_fallthru
          _
      $region36: #{_token_type_lookup.1} parent=5 // pred_fallthru
        _
    $region6: #{_token_type_lookup.1} parent=1 // loop_footer
      %s15 = sadd.s32 1, %s11
    $region7: #{_token_type_lookup.1} parent=1 // loop_footer_branch
      %10 = sbr.rel target = $region3
    $region8: #{_token_type_lookup.1} parent=1 // loop_exit
      _
    %219 = vsyncpa [#allocation3], 1
    %s220 = scalar_lea.sflag [#allocation3], 1
    %221 = vsyncpa %s220, 1

</llo_original>
